<compile_context>
chip_gen: v5e
topology: v5e:2x2
jax: 0.10.0
libtpu: 0.0.40
codegen_flags: <defaults>
</compile_context>

<pallas_src>
import jax
import jax.numpy as jnp
from jax.experimental import pallas as pl
from jax.experimental.pallas import tpu as pltpu

NUM_CLASSES = 10
IN_FEATURES = 784
PAD_LANES = 128  # padded width for fc3 output / fc4 weights / logits


def _round_up(n, m):
    return ((n + m - 1) // m) * m


def _pad_to(a, shape):
    return jnp.pad(a, [(0, t - s) for s, t in zip(a.shape, shape)])


def _mlp_kernel(x_ref,
                w1_ref, b1_ref,
                w2_ref, b2_ref,
                w3_ref, b3_ref,
                w4_ref, b4_ref,
                o_ref):
    # in-kernel f32 -> bf16 cast of the input tile (dominant HBM stream stays f32 once)
    x = x_ref[...].astype(jnp.bfloat16)  # (TB, 784)

    # fc1 + relu (bf16 MXU, f32 accumulate / elementwise)
    h = jnp.dot(x, w1_ref[...], preferred_element_type=jnp.float32) + b1_ref[...]
    h = jnp.maximum(h, 0.0).astype(jnp.bfloat16)

    # fc2 + relu
    h = jnp.dot(h, w2_ref[...], preferred_element_type=jnp.float32) + b2_ref[...]
    h = jnp.maximum(h, 0.0).astype(jnp.bfloat16)

    # fc3 + relu (padded to 128 lanes; padded columns stay exactly 0)
    h = jnp.dot(h, w3_ref[...], preferred_element_type=jnp.float32) + b3_ref[...]
    h = jnp.maximum(h, 0.0).astype(jnp.bfloat16)

    # fc4 -> (TB, 128) logits slab; columns >= 10 are padding
    logits = jnp.dot(h, w4_ref[...], preferred_element_type=jnp.float32) + b4_ref[...]

    # mask padded classes to -inf, then numerically-stable log_softmax over classes
    col = jax.lax.broadcasted_iota(jnp.int32, logits.shape, dimension=1)
    logits = jnp.where(col < NUM_CLASSES, logits, -jnp.inf)
    m = jnp.max(logits, axis=-1, keepdims=True)
    shifted = logits - m
    lse = jnp.log(jnp.sum(jnp.exp(shifted), axis=-1, keepdims=True))
    o_ref[...] = (shifted - lse).astype(o_ref.dtype)  # bf16 writeback, lane-dense


def classifier_forward(x_nchw, params, *, tb_max=1024):
    """x_nchw: (B, 1, 28, 28) float32. Returns (B, 10) f32 log-probabilities."""
    B = x_nchw.shape[0]
    x = x_nchw.reshape(B, -1)  # keep f32; cast to bf16 happens inside the kernel
    assert x.shape[1] == IN_FEATURES

    # --- batch tiling: TB multiple of 32, and >= 2 grid steps for large B (v7x) ---
    TB = max(32, min(tb_max, _round_up(pl.cdiv(B, 2), 32)))
    n_tiles = pl.cdiv(B, TB)  # partial final block handled by Pallas; no jnp.pad

    # --- weights: bf16, fc3/fc4 zero-padded to 128 lanes; biases stay f32 ---
    w1 = params["w1"].astype(jnp.bfloat16)                                   # (784, 256)
    w2 = params["w2"].astype(jnp.bfloat16)                                   # (256, 128)
    w3 = _pad_to(params["w3"], (128, PAD_LANES)).astype(jnp.bfloat16)        # (128, 128)
    w4 = _pad_to(params["w4"], (PAD_LANES, PAD_LANES)).astype(jnp.bfloat16)  # (128, 128)
    b1 = params["b1"].astype(jnp.float32)                                    # (1, 256)
    b2 = params["b2"].astype(jnp.float32)                                    # (1, 128)
    b3 = _pad_to(params["b3"], (1, PAD_LANES)).astype(jnp.float32)           # (1, 128)
    b4 = _pad_to(params["b4"], (1, PAD_LANES)).astype(jnp.float32)           # (1, 128)

    batch_spec = pl.BlockSpec((TB, IN_FEATURES), lambda i: (i, 0))
    resident = lambda a: pl.BlockSpec(a.shape, lambda i: (0, 0))  # VMEM-resident across steps

    out_bf16 = pl.pallas_call(
        _mlp_kernel,
        out_shape=jax.ShapeDtypeStruct((B, PAD_LANES), jnp.bfloat16),
        grid=(n_tiles,),
        in_specs=[batch_spec,
                  resident(w1), resident(b1),
                  resident(w2), resident(b2),
                  resident(w3), resident(b3),
                  resident(w4), resident(b4)],
        out_specs=pl.BlockSpec((TB, PAD_LANES), lambda i: (i, 0)),
        compiler_params=pltpu.CompilerParams(
            dimension_semantics=("parallel",),
            vmem_limit_bytes=32 * 1024 * 1024),
    )(x, w1, b1, w2, b2, w3, b3, w4, b4)

    return out_bf16[:, :NUM_CLASSES].astype(jnp.float32)


def init_params(key):
    """Deterministic init matching the nn.Linear shapes (stored as (in, out))."""
    dims = [784, 256, 128, 64, 10]
    params = {}
    for i, (din, dout) in enumerate(zip(dims[:-1], dims[1:]), start=1):
        key, kw, kb = jax.random.split(key, 3)
        bound = 1.0 / jnp.sqrt(din)  # PyTorch default uniform bound
        params[f"w{i}"] = jax.random.uniform(kw, (din, dout), jnp.float32, -bound, bound)
        params[f"b{i}"] = jax.random.uniform(kb, (1, dout), jnp.float32, -bound, bound)
    return params


def reference_forward(x_nchw, params):
    """Pure-f32 reference with the original module's semantics."""
    x = x_nchw.reshape(x_nchw.shape[0], -1)
    h = jnp.maximum(x @ params["w1"] + params["b1"], 0.0)
    h = jnp.maximum(h @ params["w2"] + params["b2"], 0.0)
    h = jnp.maximum(h @ params["w3"] + params["b3"], 0.0)
    logits = h @ params["w4"] + params["b4"]
    return jax.nn.log_softmax(logits, axis=1)


if __name__ == "__main__":
    key = jax.random.PRNGKey(0)
    key, kx1, kx2 = jax.random.split(key, 3)
    params = init_params(key)

    # small demo batch (NCHW like PyTorch); single (partial) tile
    B = 8
    x = jax.random.normal(kx1, (B, 1, 28, 28), jnp.float32)
    out = jax.block_until_ready(classifier_forward(x, params))
    ref = reference_forward(x, params)
    assert out.shape == (B, NUM_CLASSES)
    assert jnp.allclose(out, ref, atol=5e-2, rtol=5e-2), "mismatch vs reference (B=8)"

    # multi-tile grid with a partial final block (B=40, TB forced to 32)
    B2 = 40
    x2 = jax.random.normal(kx2, (B2, 1, 28, 28), jnp.float32)
    out2 = jax.block_until_ready(classifier_forward(x2, params, tb_max=32))
    ref2 = reference_forward(x2, params)
    assert out2.shape == (B2, NUM_CLASSES)
    assert jnp.allclose(out2, ref2, atol=5e-2, rtol=5e-2), "mismatch vs reference (B=40)"

    print("KERNEL_OK")
</pallas_src>

<mosaic_0001>
module attributes {stable_mosaic.version = 11 : i64} {
  func.func @_mlp_kernel(%arg0: i32, %arg1: memref<32x784xf32, #tpu.memory_space<vmem>>, %arg2: memref<784x256xbf16, #tpu.memory_space<vmem>>, %arg3: memref<1x256xf32, #tpu.memory_space<vmem>>, %arg4: memref<256x128xbf16, #tpu.memory_space<vmem>>, %arg5: memref<1x128xf32, #tpu.memory_space<vmem>>, %arg6: memref<128x128xbf16, #tpu.memory_space<vmem>>, %arg7: memref<1x128xf32, #tpu.memory_space<vmem>>, %arg8: memref<128x128xbf16, #tpu.memory_space<vmem>>, %arg9: memref<1x128xf32, #tpu.memory_space<vmem>>, %arg10: memref<32x128xbf16, #tpu.memory_space<vmem>>) attributes {dimension_semantics = [#tpu.dimension_semantics<parallel>], iteration_bounds = array<i64: 1>, scalar_prefetch = 0 : i64, scratch_operands = 0 : i64, tpu.core_type = #tpu.core_type<tc>, window_params = [{transform_indices = @transform_0, window_bounds = array<i64: 32, 784>}, {pipeline_mode = #tpu.pipeline_mode<synchronous>, transform_indices = @transform_1, window_bounds = array<i64: 784, 256>}, {pipeline_mode = #tpu.pipeline_mode<synchronous>, transform_indices = @transform_2, window_bounds = array<i64: 1, 256>}, {pipeline_mode = #tpu.pipeline_mode<synchronous>, transform_indices = @transform_3, window_bounds = array<i64: 256, 128>}, {pipeline_mode = #tpu.pipeline_mode<synchronous>, transform_indices = @transform_4, window_bounds = array<i64: 1, 128>}, {pipeline_mode = #tpu.pipeline_mode<synchronous>, transform_indices = @transform_5, window_bounds = array<i64: 128, 128>}, {pipeline_mode = #tpu.pipeline_mode<synchronous>, transform_indices = @transform_6, window_bounds = array<i64: 1, 128>}, {pipeline_mode = #tpu.pipeline_mode<synchronous>, transform_indices = @transform_7, window_bounds = array<i64: 128, 128>}, {pipeline_mode = #tpu.pipeline_mode<synchronous>, transform_indices = @transform_8, window_bounds = array<i64: 1, 128>}, {transform_indices = @transform_9, window_bounds = array<i64: 32, 128>}]} {
    %c0 = arith.constant 0 : index
    %c0_0 = arith.constant 0 : index
    %0 = vector.load %arg1[%c0, %c0_0] : memref<32x784xf32, #tpu.memory_space<vmem>>, vector<32x784xf32>
    %1 = arith.truncf %0 : vector<32x784xf32> to vector<32x784xbf16>
    %c0_1 = arith.constant 0 : index
    %c0_2 = arith.constant 0 : index
    %2 = vector.load %arg2[%c0_1, %c0_2] : memref<784x256xbf16, #tpu.memory_space<vmem>>, vector<784x256xbf16>
    %cst = arith.constant dense<0.000000e+00> : vector<32x256xf32>
    %3 = tpu.matmul %1, %2, %cst {dimension_numbers = #tpu.dot_dimension_numbers<[1], [0], [0], [1], [0, 0, 1, 1], [], []>} : vector<32x784xbf16>, vector<784x256xbf16>, vector<32x256xf32> -> vector<32x256xf32>
    %c0_3 = arith.constant 0 : index
    %c0_4 = arith.constant 0 : index
    %4 = vector.load %arg3[%c0_3, %c0_4] : memref<1x256xf32, #tpu.memory_space<vmem>>, vector<1x256xf32>
    %5 = vector.broadcast %4 : vector<1x256xf32> to vector<32x256xf32>
    %6 = arith.addf %3, %5 : vector<32x256xf32>
    %cst_5 = arith.constant 0.000000e+00 : f32
    %7 = vector.broadcast %cst_5 : f32 to vector<32x256xf32>
    %8 = arith.maximumf %6, %7 : vector<32x256xf32>
    %9 = arith.truncf %8 : vector<32x256xf32> to vector<32x256xbf16>
    %c0_6 = arith.constant 0 : index
    %c0_7 = arith.constant 0 : index
    %10 = vector.load %arg4[%c0_6, %c0_7] : memref<256x128xbf16, #tpu.memory_space<vmem>>, vector<256x128xbf16>
    %cst_8 = arith.constant dense<0.000000e+00> : vector<32x128xf32>
    %11 = tpu.matmul %9, %10, %cst_8 {dimension_numbers = #tpu.dot_dimension_numbers<[1], [0], [0], [1], [0, 0, 1, 1], [], []>} : vector<32x256xbf16>, vector<256x128xbf16>, vector<32x128xf32> -> vector<32x128xf32>
    %c0_9 = arith.constant 0 : index
    %c0_10 = arith.constant 0 : index
    %12 = vector.load %arg5[%c0_9, %c0_10] : memref<1x128xf32, #tpu.memory_space<vmem>>, vector<1x128xf32>
    %13 = vector.broadcast %12 : vector<1x128xf32> to vector<32x128xf32>
    %14 = arith.addf %11, %13 : vector<32x128xf32>
    %cst_11 = arith.constant 0.000000e+00 : f32
    %15 = vector.broadcast %cst_11 : f32 to vector<32x128xf32>
    %16 = arith.maximumf %14, %15 : vector<32x128xf32>
    %17 = arith.truncf %16 : vector<32x128xf32> to vector<32x128xbf16>
    %c0_12 = arith.constant 0 : index
    %c0_13 = arith.constant 0 : index
    %18 = vector.load %arg6[%c0_12, %c0_13] : memref<128x128xbf16, #tpu.memory_space<vmem>>, vector<128x128xbf16>
    %cst_14 = arith.constant dense<0.000000e+00> : vector<32x128xf32>
    %19 = tpu.matmul %17, %18, %cst_14 {dimension_numbers = #tpu.dot_dimension_numbers<[1], [0], [0], [1], [0, 0, 1, 1], [], []>} : vector<32x128xbf16>, vector<128x128xbf16>, vector<32x128xf32> -> vector<32x128xf32>
    %c0_15 = arith.constant 0 : index
    %c0_16 = arith.constant 0 : index
    %20 = vector.load %arg7[%c0_15, %c0_16] : memref<1x128xf32, #tpu.memory_space<vmem>>, vector<1x128xf32>
    %21 = vector.broadcast %20 : vector<1x128xf32> to vector<32x128xf32>
    %22 = arith.addf %19, %21 : vector<32x128xf32>
    %cst_17 = arith.constant 0.000000e+00 : f32
    %23 = vector.broadcast %cst_17 : f32 to vector<32x128xf32>
    %24 = arith.maximumf %22, %23 : vector<32x128xf32>
    %25 = arith.truncf %24 : vector<32x128xf32> to vector<32x128xbf16>
    %c0_18 = arith.constant 0 : index
    %c0_19 = arith.constant 0 : index
    %26 = vector.load %arg8[%c0_18, %c0_19] : memref<128x128xbf16, #tpu.memory_space<vmem>>, vector<128x128xbf16>
    %cst_20 = arith.constant dense<0.000000e+00> : vector<32x128xf32>
    %27 = tpu.matmul %25, %26, %cst_20 {dimension_numbers = #tpu.dot_dimension_numbers<[1], [0], [0], [1], [0, 0, 1, 1], [], []>} : vector<32x128xbf16>, vector<128x128xbf16>, vector<32x128xf32> -> vector<32x128xf32>
    %c0_21 = arith.constant 0 : index
    %c0_22 = arith.constant 0 : index
    %28 = vector.load %arg9[%c0_21, %c0_22] : memref<1x128xf32, #tpu.memory_space<vmem>>, vector<1x128xf32>
    %29 = vector.broadcast %28 : vector<1x128xf32> to vector<32x128xf32>
    %30 = arith.addf %27, %29 : vector<32x128xf32>
    %31 = tpu.iota {dimensions = array<i32: 1>} : vector<32x128xi32>
    %c10_i32 = arith.constant 10 : i32
    %32 = vector.broadcast %c10_i32 : i32 to vector<32x128xi32>
    %33 = arith.cmpi slt, %31, %32 : vector<32x128xi32>
    %cst_23 = arith.constant 0xFF800000 : f32
    %34 = vector.broadcast %cst_23 : f32 to vector<32x128xf32>
    %35 = arith.select %33, %30, %34 : vector<32x128xi1>, vector<32x128xf32>
    %cst_24 = arith.constant dense<0xFF800000> : vector<32xf32>
    %36 = vector.multi_reduction <maximumf>, %35, %cst_24 [1] : vector<32x128xf32> to vector<32xf32>
    %37 = vector.shape_cast %36 : vector<32xf32> to vector<32x1xf32>
    %38 = vector.broadcast %37 : vector<32x1xf32> to vector<32x128xf32>
    %39 = arith.subf %35, %38 : vector<32x128xf32>
    %40 = math.exp %39 : vector<32x128xf32>
    %cst_25 = arith.constant dense<0.000000e+00> : vector<32xf32>
    %41 = vector.multi_reduction <add>, %40, %cst_25 [1] : vector<32x128xf32> to vector<32xf32>
    %42 = vector.shape_cast %41 : vector<32xf32> to vector<32x1xf32>
    %43 = math.log %42 : vector<32x1xf32>
    %44 = vector.broadcast %43 : vector<32x1xf32> to vector<32x128xf32>
    %45 = arith.subf %39, %44 : vector<32x128xf32>
    %46 = arith.truncf %45 : vector<32x128xf32> to vector<32x128xbf16>
    %c0_26 = arith.constant 0 : index
    %c0_27 = arith.constant 0 : index
    %47 = vector.load %arg10[%c0_26, %c0_27] : memref<32x128xbf16, #tpu.memory_space<vmem>>, vector<32x128xbf16>
    tpu.vector_store %arg10[%c0_26, %c0_27], %46 {strides = array<i32>} : memref<32x128xbf16, #tpu.memory_space<vmem>>, vector<32x128xbf16>,
    return
  }
  func.func @transform_0(%arg0: i32) -> (i32, i32) {
    %c0_i32 = arith.constant 0 : i32
    %c0_i32_0 = arith.constant 0 : i32
    return %arg0, %c0_i32 : i32, i32
  }
  func.func @transform_1(%arg0: i32) -> (i32, i32) {
    %c0_i32 = arith.constant 0 : i32
    %c0_i32_0 = arith.constant 0 : i32
    %c0_i32_1 = arith.constant 0 : i32
    return %c0_i32, %c0_i32_0 : i32, i32
  }
  func.func @transform_2(%arg0: i32) -> (i32, i32) {
    %c0_i32 = arith.constant 0 : i32
    %c0_i32_0 = arith.constant 0 : i32
    %c0_i32_1 = arith.constant 0 : i32
    return %c0_i32, %c0_i32_0 : i32, i32
  }
  func.func @transform_3(%arg0: i32) -> (i32, i32) {
    %c0_i32 = arith.constant 0 : i32
    %c0_i32_0 = arith.constant 0 : i32
    %c0_i32_1 = arith.constant 0 : i32
    return %c0_i32, %c0_i32_0 : i32, i32
  }
  func.func @transform_4(%arg0: i32) -> (i32, i32) {
    %c0_i32 = arith.constant 0 : i32
    %c0_i32_0 = arith.constant 0 : i32
    %c0_i32_1 = arith.constant 0 : i32
    return %c0_i32, %c0_i32_0 : i32, i32
  }
  func.func @transform_5(%arg0: i32) -> (i32, i32) {
    %c0_i32 = arith.constant 0 : i32
    %c0_i32_0 = arith.constant 0 : i32
    %c0_i32_1 = arith.constant 0 : i32
    return %c0_i32, %c0_i32_0 : i32, i32
  }
  func.func @transform_6(%arg0: i32) -> (i32, i32) {
    %c0_i32 = arith.constant 0 : i32
    %c0_i32_0 = arith.constant 0 : i32
    %c0_i32_1 = arith.constant 0 : i32
    return %c0_i32, %c0_i32_0 : i32, i32
  }
  func.func @transform_7(%arg0: i32) -> (i32, i32) {
    %c0_i32 = arith.constant 0 : i32
    %c0_i32_0 = arith.constant 0 : i32
    %c0_i32_1 = arith.constant 0 : i32
    return %c0_i32, %c0_i32_0 : i32, i32
  }
  func.func @transform_8(%arg0: i32) -> (i32, i32) {
    %c0_i32 = arith.constant 0 : i32
    %c0_i32_0 = arith.constant 0 : i32
    %c0_i32_1 = arith.constant 0 : i32
    return %c0_i32, %c0_i32_0 : i32, i32
  }
  func.func @transform_9(%arg0: i32) -> (i32, i32) {
    %c0_i32 = arith.constant 0 : i32
    %c0_i32_0 = arith.constant 0 : i32
    return %arg0, %c0_i32 : i32, i32
  }
}

</mosaic_0001>

<llo_original>
// kernel: tpu_custom_call.1
$region0: #{tpu_custom_call.1}
  #allocation0 [shape = 'u32[]', space=smem, size = 0x4, offset = 0x4, fixed_abs, tag = 'smem constant byte address 0x4 - core index']
  #allocation1 [shape = 'u32[72,128]{1,0:T(1,128)}', space=vmem, size = 0x9000, scoped, tag = 'internal scratch']
  %s0 = inlined_call_operand.hbm [shape: f32[8,784], index: 0, kind: input, shape index: {}]
  %s1 = inlined_call_operand.hbm [shape: bf16[784,256], index: 1, kind: input, shape index: {}]
  %s2 = inlined_call_operand.hbm [shape: f32[1,256], index: 2, kind: input, shape index: {}]
  %s3 = inlined_call_operand.hbm [shape: bf16[256,128], index: 3, kind: input, shape index: {}]
  %s4 = inlined_call_operand.vmem [shape: f32[1,128], index: 4, kind: input, shape index: {}]
  %s5 = inlined_call_operand.hbm [shape: bf16[128,128], index: 5, kind: input, shape index: {}]
  %s6 = inlined_call_operand.vmem [shape: f32[1,128], index: 6, kind: input, shape index: {}]
  %s7 = inlined_call_operand.hbm [shape: bf16[128,128], index: 7, kind: input, shape index: {}]
  %s8 = inlined_call_operand.vmem [shape: f32[1,128], index: 8, kind: input, shape index: {}]
  %s9 = inlined_call_operand.hbm [shape: bf16[8,128], index: 9, kind: output, shape index: {}]
  %s10 = sld [smem:[#allocation0]]
  $region70: #{tpu_custom_call.1} parent=0
    _
  %s12 = ssub.s32 1, %s10
  %s13 = scalar_select 0, %s12, %s10
  $region1: #{tpu_custom_call.1} parent=0
    #allocation2 [shape = 'u8[114688]{0}', space=vmem, size = 0x1c000, scoped, tag = 'input window, operand 0, single buffered']
    #allocation3 [shape = 's32[1]{0}', space=sflag, size = 0x4, scoped, tag = 'scoped memory for tpu_custom_call.1']
    #allocation4 [shape = 's32[1]{0}', space=sflag, size = 0x4, scoped, tag = 'scoped memory for tpu_custom_call.1']
    #allocation5 [shape = 'u8[401408]{0}', space=vmem, size = 0x62000, scoped, tag = 'input window, operand 1, single buffered']
    #allocation6 [shape = 's32[1]{0}', space=sflag, size = 0x4, scoped, tag = 'scoped memory for tpu_custom_call.1']
    #allocation7 [shape = 'u8[1024]{0}', space=vmem, size = 0x400, scoped, tag = 'input window, operand 2, single buffered']
    #allocation8 [shape = 'u8[65536]{0}', space=vmem, size = 0x10000, scoped, tag = 'input window, operand 3, single buffered']
    #allocation9 [shape = 's32[1]{0}', space=sflag, size = 0x4, scoped, tag = 'scoped memory for tpu_custom_call.1']
    #allocation10 [shape = 'u8[32768]{0}', space=vmem, size = 0x8000, scoped, tag = 'input window, operand 5, single buffered']
    #allocation11 [shape = 'u8[32768]{0}', space=vmem, size = 0x8000, scoped, tag = 'input window, operand 7, single buffered']
    #allocation12 [shape = 's32[1]{0}', space=sflag, size = 0x4, scoped, tag = 'scoped memory for tpu_custom_call.1']
    #allocation13 [shape = 'u8[8192]{0}', space=vmem, size = 0x2000, scoped, tag = 'output window, operand 0, single buffered']
    %14 = vsyncpa [#allocation3], 0
    %15 = vsyncpa [#allocation6], 0
    %16 = vsyncpa [#allocation9], 0
    %17 = vsyncpa [#allocation12], 0
    %18 = vsyncpa [#allocation4], 0
    // Predicated region
    $region2: #{tpu_custom_call.1} parent=1 // pred_check
      _
    $region3: #{tpu_custom_call.1} parent=1 // pred_check_branch
      %20 = sbr.rel (0) target = $region5
    $region4: #{tpu_custom_call.1} parent=1 // pred_region
      %22 = vsyncadd [#allocation3], 2688
      %s23 = sshll.u32 %s0, 4
      %s24 = int_to_ptr.hbm [resolvable:$true] %s23
      %s25 = sshll.u32 [#allocation2], 4
      %s26 = int_to_ptr.vmem [resolvable:$true] %s25
      %31 = dma.hbm_to_vmem [thread:$0]  %s24, 896, %s26, [#allocation3], 896, 896, 56
    $region5: #{tpu_custom_call.1} parent=1 // pred_fallthru
      _
    // Predicated region
    $region6: #{tpu_custom_call.1} parent=1 // pred_check
      _
    $region7: #{tpu_custom_call.1} parent=1 // pred_check_branch
      %33 = sbr.rel (0) target = $region9
    $region8: #{tpu_custom_call.1} parent=1 // pred_region
      %35 = vsyncadd [#allocation6], 0
      %s36 = sshll.u32 %s1, 4
      %s37 = int_to_ptr.hbm [resolvable:$true] %s36
      %s38 = sshll.u32 [#allocation5], 4
      %s39 = int_to_ptr.vmem [resolvable:$true] %s38
      %44 = dma.hbm_to_vmem [thread:$0]  %s37, 12544, %s39, [#allocation6], 128, 128, 8
    $region9: #{tpu_custom_call.1} parent=1 // pred_fallthru
      _
    // Predicated region
    $region10: #{tpu_custom_call.1} parent=1 // pred_check
      _
    $region11: #{tpu_custom_call.1} parent=1 // pred_check_branch
      %46 = sbr.rel (0) target = $region13
    $region12: #{tpu_custom_call.1} parent=1 // pred_region
      %48 = vsyncadd [#allocation6], 0
      %s50 = sshll.u32 %s2, 4
      %s51 = int_to_ptr.hbm [resolvable:$true] %s50
      %s52 = sshll.u32 [#allocation7], 4
      %s53 = int_to_ptr.vmem [resolvable:$true] %s52
      %55 = dma.hbm_to_vmem [thread:$0]  %s51, 32, %s53, [#allocation6]
    $region13: #{tpu_custom_call.1} parent=1 // pred_fallthru
      _
    // Predicated region
    $region14: #{tpu_custom_call.1} parent=1 // pred_check
      _
    $region15: #{tpu_custom_call.1} parent=1 // pred_check_branch
      %57 = sbr.rel (0) target = $region17
    $region16: #{tpu_custom_call.1} parent=1 // pred_region
      %59 = vsyncadd [#allocation9], 0
      %s60 = sshll.u32 %s3, 4
      %s61 = int_to_ptr.hbm [resolvable:$true] %s60
      %s62 = sshll.u32 [#allocation8], 4
      %s63 = int_to_ptr.vmem [resolvable:$true] %s62
      %68 = dma.hbm_to_vmem [thread:$0]  %s61, 2048, %s63, [#allocation9], 64, 64, 4
    $region17: #{tpu_custom_call.1} parent=1 // pred_fallthru
      _
    // Predicated region
    $region18: #{tpu_custom_call.1} parent=1 // pred_check
      _
    $region19: #{tpu_custom_call.1} parent=1 // pred_check_branch
      %70 = sbr.rel (0) target = $region21
    $region20: #{tpu_custom_call.1} parent=1 // pred_region
      _
    $region21: #{tpu_custom_call.1} parent=1 // pred_fallthru
      _
    // Predicated region
    $region22: #{tpu_custom_call.1} parent=1 // pred_check
      _
    $region23: #{tpu_custom_call.1} parent=1 // pred_check_branch
      %72 = sbr.rel (0) target = $region25
    $region24: #{tpu_custom_call.1} parent=1 // pred_region
      %74 = vsyncadd [#allocation9], 0
      %s75 = sshll.u32 %s5, 4
      %s76 = int_to_ptr.hbm [resolvable:$true] %s75
      %s77 = sshll.u32 [#allocation10], 4
      %s78 = int_to_ptr.vmem [resolvable:$true] %s77
      %83 = dma.hbm_to_vmem [thread:$0]  %s76, 1024, %s78, [#allocation9], 64, 64, 4
    $region25: #{tpu_custom_call.1} parent=1 // pred_fallthru
      _
    // Predicated region
    $region26: #{tpu_custom_call.1} parent=1 // pred_check
      _
    $region27: #{tpu_custom_call.1} parent=1 // pred_check_branch
      %85 = sbr.rel (0) target = $region29
    $region28: #{tpu_custom_call.1} parent=1 // pred_region
      _
    $region29: #{tpu_custom_call.1} parent=1 // pred_fallthru
      _
    // Predicated region
    $region30: #{tpu_custom_call.1} parent=1 // pred_check
      _
    $region31: #{tpu_custom_call.1} parent=1 // pred_check_branch
      %87 = sbr.rel (0) target = $region33
    $region32: #{tpu_custom_call.1} parent=1 // pred_region
      %89 = vsyncadd [#allocation12], 0
      %s90 = sshll.u32 %s7, 4
      %s91 = int_to_ptr.hbm [resolvable:$true] %s90
      %s92 = sshll.u32 [#allocation11], 4
      %s93 = int_to_ptr.vmem [resolvable:$true] %s92
      %98 = dma.hbm_to_vmem [thread:$0]  %s91, 1024, %s93, [#allocation12], 64, 64, 4
    $region33: #{tpu_custom_call.1} parent=1 // pred_fallthru
      _
    // Predicated region
    $region34: #{tpu_custom_call.1} parent=1 // pred_check
      _
    $region35: #{tpu_custom_call.1} parent=1 // pred_check_branch
      %100 = sbr.rel (0) target = $region37
    $region36: #{tpu_custom_call.1} parent=1 // pred_region
      _
    $region37: #{tpu_custom_call.1} parent=1 // pred_fallthru
      _
    // Predicated region
    $region38: #{tpu_custom_call.1} parent=1 // pred_check
      _
    $region39: #{tpu_custom_call.1} parent=1 // pred_check_branch
      %102 = sbr.rel (0) target = $region41
    $region40: #{tpu_custom_call.1} parent=1 // pred_region
      %104 = dma.done [#allocation3], 3584
    $region41: #{tpu_custom_call.1} parent=1 // pred_fallthru
      _
    // Predicated region
    $region42: #{tpu_custom_call.1} parent=1 // pred_check
      _
    $region43: #{tpu_custom_call.1} parent=1 // pred_check_branch
      %106 = sbr.rel (0) target = $region45
    $region44: #{tpu_custom_call.1} parent=1 // pred_region
      %108 = dma.done [#allocation6], 12544
    $region45: #{tpu_custom_call.1} parent=1 // pred_fallthru
      _
    // Predicated region
    $region46: #{tpu_custom_call.1} parent=1 // pred_check
      _
    $region47: #{tpu_custom_call.1} parent=1 // pred_check_branch
      %110 = sbr.rel (0) target = $region49
    $region48: #{tpu_custom_call.1} parent=1 // pred_region
      %112 = dma.done [#allocation6], 32
    $region49: #{tpu_custom_call.1} parent=1 // pred_fallthru
      _
    // Predicated region
    $region50: #{tpu_custom_call.1} parent=1 // pred_check
      _
    $region51: #{tpu_custom_call.1} parent=1 // pred_check_branch
      %114 = sbr.rel (0) target = $region53
    $region52: #{tpu_custom_call.1} parent=1 // pred_region
      %116 = dma.done [#allocation9], 2048
    $region53: #{tpu_custom_call.1} parent=1 // pred_fallthru
      _
    // Predicated region
    $region54: #{tpu_custom_call.1} parent=1 // pred_check
      _
    $region55: #{tpu_custom_call.1} parent=1 // pred_check_branch
      %118 = sbr.rel (0) target = $region57
    $region56: #{tpu_custom_call.1} parent=1 // pred_region
      %120 = dma.done [#allocation9], 1024
    $region57: #{tpu_custom_call.1} parent=1 // pred_fallthru
      _
    // Predicated region
    $region58: #{tpu_custom_call.1} parent=1 // pred_check
      _
    $region59: #{tpu_custom_call.1} parent=1 // pred_check_branch
      %122 = sbr.rel (0) target = $region61
    $region60: #{tpu_custom_call.1} parent=1 // pred_region
      %124 = dma.done [#allocation12], 1024
    $region61: #{tpu_custom_call.1} parent=1 // pred_fallthru
      _
    %v126 = vld [vmem:[#allocation2] sm:$0xff]
    %v127 = vld [vmem:[#allocation2 + $0x8] sm:$0xff]
    %v128 = vld [vmem:[#allocation2 + $0x10] sm:$0xff]
    %v129 = vld [vmem:[#allocation2 + $0x18] sm:$0xff]
    %v130 = vld [vmem:[#allocation2 + $0x20] sm:$0xff]
    %v131 = vld [vmem:[#allocation2 + $0x28] sm:$0xff]
    %v132 = vld [vmem:[#allocation2 + $0x30] sm:$0xff]
    %v133 = vld [vmem:[#allocation2 + $0x38] sm:$0xff]
    %v134 = vld [vmem:[#allocation2 + $0x40] sm:$0xff]
    %v135 = vld [vmem:[#allocation2 + $0x48] sm:$0xff]
    %v136 = vld [vmem:[#allocation2 + $0x50] sm:$0xff]
    %v137 = vld [vmem:[#allocation2 + $0x58] sm:$0xff]
    %v138 = vld [vmem:[#allocation2 + $0x60] sm:$0xff]
    %v139 = vld [vmem:[#allocation2 + $0x68] sm:$0xff]
    %v140 = vld [vmem:[#allocation2 + $0x70] sm:$0xff]
    %v141 = vld [vmem:[#allocation2 + $0x78] sm:$0xff]
    %v142 = vld [vmem:[#allocation2 + $0x80] sm:$0xff]
    %v143 = vld [vmem:[#allocation2 + $0x88] sm:$0xff]
    %v144 = vld [vmem:[#allocation2 + $0x90] sm:$0xff]
    %v145 = vld [vmem:[#allocation2 + $0x98] sm:$0xff]
    %v146 = vld [vmem:[#allocation2 + $0xa0] sm:$0xff]
    %v147 = vld [vmem:[#allocation2 + $0xa8] sm:$0xff]
    %v148 = vld [vmem:[#allocation2 + $0xb0] sm:$0xff]
    %v149 = vld [vmem:[#allocation2 + $0xb8] sm:$0xff]
    %v150 = vld [vmem:[#allocation2 + $0xc0] sm:$0xff]
    %v151 = vld [vmem:[#allocation2 + $0xc8] sm:$0xff]
    %v152 = vld [vmem:[#allocation2 + $0xd0] sm:$0xff]
    %v153 = vld [vmem:[#allocation2 + $0xd8] sm:$0xff]
    %v154 = vpack.c.bf16 %v133, %v126
    %v155 = vpack.c.bf16 %v134, %v127
    %v156 = vpack.c.bf16 %v135, %v128
    %v157 = vpack.c.bf16 %v136, %v129
    %v158 = vpack.c.bf16 %v137, %v130
    %v159 = vpack.c.bf16 %v138, %v131
    %v160 = vpack.c.bf16 %v139, %v132
    %v161 = vpack.c.bf16 %v147, %v140
    %v162 = vpack.c.bf16 %v148, %v141
    %v163 = vpack.c.bf16 %v149, %v142
    %v164 = vpack.c.bf16 %v150, %v143
    %v165 = vpack.c.bf16 %v151, %v144
    %v166 = vpack.c.bf16 %v152, %v145
    %v167 = vpack.c.bf16 %v153, %v146
    %v168 = vld [vmem:[#allocation5] sm:$0xff]
    %v169 = vld [vmem:[#allocation5 + $0x8] sm:$0xff]
    %v170 = vld [vmem:[#allocation5 + $0x10] sm:$0xff]
    %v171 = vld [vmem:[#allocation5 + $0x18] sm:$0xff]
    %v172 = vld [vmem:[#allocation5 + $0x20] sm:$0xff]
    %v173 = vld [vmem:[#allocation5 + $0x28] sm:$0xff]
    %v174 = vld [vmem:[#allocation5 + $0x30] sm:$0xff]
    %v175 = vld [vmem:[#allocation5 + $0x38] sm:$0xff]
    %v176 = vld [vmem:[#allocation5 + $0x40] sm:$0xff]
    %v177 = vld [vmem:[#allocation5 + $0x48] sm:$0xff]
    %v178 = vld [vmem:[#allocation5 + $0x50] sm:$0xff]
    %v179 = vld [vmem:[#allocation5 + $0x58] sm:$0xff]
    %v180 = vld [vmem:[#allocation5 + $0x60] sm:$0xff]
    %v181 = vld [vmem:[#allocation5 + $0x68] sm:$0xff]
    %v182 = vld [vmem:[#allocation5 + $0x70] sm:$0xff]
    %v183 = vld [vmem:[#allocation5 + $0x78] sm:$0xff]
    %v184 = vld [vmem:[#allocation5 + $0x80] sm:$0xff]
    %v185 = vld [vmem:[#allocation5 + $0x88] sm:$0xff]
    %v186 = vld [vmem:[#allocation5 + $0x90] sm:$0xff]
    %v187 = vld [vmem:[#allocation5 + $0x98] sm:$0xff]
    %v188 = vld [vmem:[#allocation5 + $0xa0] sm:$0xff]
    %v189 = vld [vmem:[#allocation5 + $0xa8] sm:$0xff]
    %v190 = vld [vmem:[#allocation5 + $0xb0] sm:$0xff]
    %v191 = vld [vmem:[#allocation5 + $0xb8] sm:$0xff]
    %v192 = vld [vmem:[#allocation5 + $0xc0] sm:$0xff]
    %v193 = vld [vmem:[#allocation5 + $0xc8] sm:$0xff]
    %v194 = vld [vmem:[#allocation5 + $0xd0] sm:$0xff]
    %v195 = vld [vmem:[#allocation5 + $0xd8] sm:$0xff]
    %v196 = vld [vmem:[#allocation5 + $0xe0] sm:$0xff]
    %v197 = vld [vmem:[#allocation5 + $0xe8] sm:$0xff]
    %v198 = vld [vmem:[#allocation5 + $0xf0] sm:$0xff]
    %v199 = vld [vmem:[#allocation5 + $0xf8] sm:$0xff]
    %v200 = vld [vmem:[#allocation5 + $0x100] sm:$0xff]
    %v201 = vld [vmem:[#allocation5 + $0x108] sm:$0xff]
    %v202 = vld [vmem:[#allocation5 + $0x110] sm:$0xff]
    %v203 = vld [vmem:[#allocation5 + $0x118] sm:$0xff]
    %v204 = vld [vmem:[#allocation5 + $0x120] sm:$0xff]
    %v205 = vld [vmem:[#allocation5 + $0x128] sm:$0xff]
    %v206 = vld [vmem:[#allocation5 + $0x130] sm:$0xff]
    %v207 = vld [vmem:[#allocation5 + $0x138] sm:$0xff]
    %v208 = vld [vmem:[#allocation5 + $0x140] sm:$0xff]
    %v209 = vld [vmem:[#allocation5 + $0x148] sm:$0xff]
    %v210 = vld [vmem:[#allocation5 + $0x150] sm:$0xff]
    %v211 = vld [vmem:[#allocation5 + $0x158] sm:$0xff]
    %v212 = vld [vmem:[#allocation5 + $0x160] sm:$0xff]
    %v213 = vld [vmem:[#allocation5 + $0x168] sm:$0xff]
    %v214 = vld [vmem:[#allocation5 + $0x170] sm:$0xff]
    %v215 = vld [vmem:[#allocation5 + $0x178] sm:$0xff]
    %v216 = vld [vmem:[#allocation5 + $0x180] sm:$0xff]
    %v217 = vld [vmem:[#allocation5 + $0x188] sm:$0xff]
    %v218 = vld [vmem:[#allocation5 + $0x190] sm:$0xff]
    %v219 = vld [vmem:[#allocation5 + $0x198] sm:$0xff]
    %v220 = vld [vmem:[#allocation5 + $0x1a0] sm:$0xff]
    %v221 = vld [vmem:[#allocation5 + $0x1a8] sm:$0xff]
    %v222 = vld [vmem:[#allocation5 + $0x1b0] sm:$0xff]
    %v223 = vld [vmem:[#allocation5 + $0x1b8] sm:$0xff]
    %v224 = vld [vmem:[#allocation5 + $0x1c0] sm:$0xff]
    %v225 = vld [vmem:[#allocation5 + $0x1c8] sm:$0xff]
    %v226 = vld [vmem:[#allocation5 + $0x1d0] sm:$0xff]
    %v227 = vld [vmem:[#allocation5 + $0x1d8] sm:$0xff]
    %v228 = vld [vmem:[#allocation5 + $0x1e0] sm:$0xff]
    %v229 = vld [vmem:[#allocation5 + $0x1e8] sm:$0xff]
    %v230 = vld [vmem:[#allocation5 + $0x1f0] sm:$0xff]
    %v231 = vld [vmem:[#allocation5 + $0x1f8] sm:$0xff]
    %v232 = vld [vmem:[#allocation5 + $0x200] sm:$0xff]
    %v233 = vld [vmem:[#allocation5 + $0x208] sm:$0xff]
    %v234 = vld [vmem:[#allocation5 + $0x210] sm:$0xff]
    %v235 = vld [vmem:[#allocation5 + $0x218] sm:$0xff]
    %v236 = vld [vmem:[#allocation5 + $0x220] sm:$0xff]
    %v237 = vld [vmem:[#allocation5 + $0x228] sm:$0xff]
    %v238 = vld [vmem:[#allocation5 + $0x230] sm:$0xff]
    %v239 = vld [vmem:[#allocation5 + $0x238] sm:$0xff]
    %v240 = vld [vmem:[#allocation5 + $0x240] sm:$0xff]
    %v241 = vld [vmem:[#allocation5 + $0x248] sm:$0xff]
    %v242 = vld [vmem:[#allocation5 + $0x250] sm:$0xff]
    %v243 = vld [vmem:[#allocation5 + $0x258] sm:$0xff]
    %v244 = vld [vmem:[#allocation5 + $0x260] sm:$0xff]
    %v245 = vld [vmem:[#allocation5 + $0x268] sm:$0xff]
    %v246 = vld [vmem:[#allocation5 + $0x270] sm:$0xff]
    %v247 = vld [vmem:[#allocation5 + $0x278] sm:$0xff]
    %v248 = vld [vmem:[#allocation5 + $0x280] sm:$0xff]
    %v249 = vld [vmem:[#allocation5 + $0x288] sm:$0xff]
    %v250 = vld [vmem:[#allocation5 + $0x290] sm:$0xff]
    %v251 = vld [vmem:[#allocation5 + $0x298] sm:$0xff]
    %v252 = vld [vmem:[#allocation5 + $0x2a0] sm:$0xff]
    %v253 = vld [vmem:[#allocation5 + $0x2a8] sm:$0xff]
    %v254 = vld [vmem:[#allocation5 + $0x2b0] sm:$0xff]
    %v255 = vld [vmem:[#allocation5 + $0x2b8] sm:$0xff]
    %v256 = vld [vmem:[#allocation5 + $0x2c0] sm:$0xff]
    %v257 = vld [vmem:[#allocation5 + $0x2c8] sm:$0xff]
    %v258 = vld [vmem:[#allocation5 + $0x2d0] sm:$0xff]
    %v259 = vld [vmem:[#allocation5 + $0x2d8] sm:$0xff]
    %v260 = vld [vmem:[#allocation5 + $0x2e0] sm:$0xff]
    %v261 = vld [vmem:[#allocation5 + $0x2e8] sm:$0xff]
    %v262 = vld [vmem:[#allocation5 + $0x2f0] sm:$0xff]
    %v263 = vld [vmem:[#allocation5 + $0x2f8] sm:$0xff]
    %v264 = vld [vmem:[#allocation5 + $0x300] sm:$0xff]
    %v265 = vld [vmem:[#allocation5 + $0x308] sm:$0xff]
    %v266 = vld [vmem:[#allocation7] sm:$0x3]
    %v268 = vperm.slane %v266, 0
    %v269 = vperm.slane %v266, 1
    %v370 = vunpack.c.l.b16 %v168
    %v371 = vunpack.c.h.b16 %v168
    %v372 = vunpack.c.l.b16 %v169
    %v373 = vunpack.c.h.b16 %v169
    %v374 = vunpack.c.l.b16 %v170
    %v375 = vunpack.c.h.b16 %v170
    %v376 = vunpack.c.l.b16 %v171
    %v377 = vunpack.c.h.b16 %v171
    %v378 = vunpack.c.l.b16 %v172
    %v379 = vunpack.c.h.b16 %v172
    %v380 = vunpack.c.l.b16 %v173
    %v381 = vunpack.c.h.b16 %v173
    %v382 = vunpack.c.l.b16 %v174
    %v383 = vunpack.c.h.b16 %v174
    %v384 = vunpack.c.l.b16 %v175
    %v385 = vunpack.c.h.b16 %v175
    %v386 = vunpack.c.l.b16 %v176
    %v387 = vunpack.c.h.b16 %v176
    %v388 = vunpack.c.l.b16 %v177
    %v389 = vunpack.c.h.b16 %v177
    %v390 = vunpack.c.l.b16 %v178
    %v391 = vunpack.c.h.b16 %v178
    %v392 = vunpack.c.l.b16 %v179
    %v393 = vunpack.c.h.b16 %v179
    %v394 = vunpack.c.l.b16 %v180
    %v395 = vunpack.c.h.b16 %v180
    %v396 = vunpack.c.l.b16 %v181
    %v397 = vunpack.c.h.b16 %v181
    %v398 = vunpack.c.l.b16 %v182
    %v399 = vunpack.c.h.b16 %v182
    %v400 = vunpack.c.l.b16 %v183
    %v401 = vunpack.c.h.b16 %v183
    %v402 = vunpack.c.l.b16 %v184
    %v403 = vunpack.c.h.b16 %v184
    %v404 = vunpack.c.l.b16 %v185
    %v405 = vunpack.c.h.b16 %v185
    %v406 = vunpack.c.l.b16 %v186
    %v407 = vunpack.c.h.b16 %v186
    %v408 = vunpack.c.l.b16 %v187
    %v409 = vunpack.c.h.b16 %v187
    %v410 = vunpack.c.l.b16 %v188
    %v411 = vunpack.c.h.b16 %v188
    %v412 = vunpack.c.l.b16 %v189
    %v413 = vunpack.c.h.b16 %v189
    %v414 = vunpack.c.l.b16 %v190
    %v415 = vunpack.c.h.b16 %v190
    %v416 = vunpack.c.l.b16 %v191
    %v417 = vunpack.c.h.b16 %v191
    %v418 = vunpack.c.l.b16 %v192
    %v419 = vunpack.c.h.b16 %v192
    %v420 = vunpack.c.l.b16 %v193
    %v421 = vunpack.c.h.b16 %v193
    %v422 = vunpack.c.l.b16 %v194
    %v423 = vunpack.c.h.b16 %v194
    %v424 = vunpack.c.l.b16 %v195
    %v425 = vunpack.c.h.b16 %v195
    %v426 = vunpack.c.l.b16 %v196
    %v427 = vunpack.c.h.b16 %v196
    %v428 = vunpack.c.l.b16 %v197
    %v429 = vunpack.c.h.b16 %v197
    %v430 = vunpack.c.l.b16 %v198
    %v431 = vunpack.c.h.b16 %v198
    %v432 = vunpack.c.l.b16 %v199
    %v433 = vunpack.c.h.b16 %v199
    %v434 = vunpack.c.l.b16 %v200
    %v435 = vunpack.c.h.b16 %v200
    %v436 = vunpack.c.l.b16 %v201
    %v437 = vunpack.c.h.b16 %v201
    %v438 = vunpack.c.l.b16 %v202
    %v439 = vunpack.c.h.b16 %v202
    %v440 = vunpack.c.l.b16 %v203
    %v441 = vunpack.c.h.b16 %v203
    %v442 = vunpack.c.l.b16 %v204
    %v443 = vunpack.c.h.b16 %v204
    %v444 = vunpack.c.l.b16 %v205
    %v445 = vunpack.c.h.b16 %v205
    %v446 = vunpack.c.l.b16 %v206
    %v447 = vunpack.c.h.b16 %v206
    %v448 = vunpack.c.l.b16 %v207
    %v449 = vunpack.c.h.b16 %v207
    %v450 = vunpack.c.l.b16 %v208
    %v451 = vunpack.c.h.b16 %v208
    %v452 = vunpack.c.l.b16 %v209
    %v453 = vunpack.c.h.b16 %v209
    %v454 = vunpack.c.l.b16 %v210
    %v455 = vunpack.c.h.b16 %v210
    %v456 = vunpack.c.l.b16 %v211
    %v457 = vunpack.c.h.b16 %v211
    %v458 = vunpack.c.l.b16 %v212
    %v459 = vunpack.c.h.b16 %v212
    %v460 = vunpack.c.l.b16 %v213
    %v461 = vunpack.c.h.b16 %v213
    %v462 = vunpack.c.l.b16 %v214
    %v463 = vunpack.c.h.b16 %v214
    %v464 = vunpack.c.l.b16 %v215
    %v465 = vunpack.c.h.b16 %v215
    %v466 = vunpack.c.l.b16 %v216
    %v467 = vunpack.c.h.b16 %v216
    %v468 = vunpack.c.l.b16 %v217
    %v469 = vunpack.c.h.b16 %v217
    %v470 = vunpack.c.l.b16 %v218
    %v471 = vunpack.c.h.b16 %v218
    %v472 = vunpack.c.l.b16 %v219
    %v473 = vunpack.c.h.b16 %v219
    %v474 = vunpack.c.l.b16 %v220
    %v475 = vunpack.c.h.b16 %v220
    %v476 = vunpack.c.l.b16 %v221
    %v477 = vunpack.c.h.b16 %v221
    %v478 = vunpack.c.l.b16 %v222
    %v479 = vunpack.c.h.b16 %v222
    %v480 = vunpack.c.l.b16 %v223
    %v481 = vunpack.c.h.b16 %v223
    %v482 = vunpack.c.l.b16 %v224
    %v483 = vunpack.c.h.b16 %v224
    %v484 = vunpack.c.l.b16 %v225
    %v485 = vunpack.c.h.b16 %v225
    %v486 = vunpack.c.l.b16 %v226
    %v487 = vunpack.c.h.b16 %v226
    %v488 = vunpack.c.l.b16 %v227
    %v489 = vunpack.c.h.b16 %v227
    %v490 = vunpack.c.l.b16 %v228
    %v491 = vunpack.c.h.b16 %v228
    %v492 = vunpack.c.l.b16 %v229
    %v493 = vunpack.c.h.b16 %v229
    %v494 = vunpack.c.l.b16 %v230
    %v495 = vunpack.c.h.b16 %v230
    %v496 = vunpack.c.l.b16 %v231
    %v497 = vunpack.c.h.b16 %v231
    %v498 = vunpack.c.l.b16 %v232
    %v499 = vunpack.c.h.b16 %v232
    %v500 = vunpack.c.l.b16 %v233
    %v501 = vunpack.c.h.b16 %v233
    %v502 = vunpack.c.l.b16 %v234
    %v503 = vunpack.c.h.b16 %v234
    %v504 = vunpack.c.l.b16 %v235
    %v505 = vunpack.c.h.b16 %v235
    %v506 = vunpack.c.l.b16 %v236
    %v507 = vunpack.c.h.b16 %v236
    %v508 = vunpack.c.l.b16 %v237
    %v509 = vunpack.c.h.b16 %v237
    %v510 = vunpack.c.l.b16 %v238
    %v511 = vunpack.c.h.b16 %v238
    %v512 = vunpack.c.l.b16 %v239
    %v513 = vunpack.c.h.b16 %v239
    %v514 = vunpack.c.l.b16 %v240
    %v515 = vunpack.c.h.b16 %v240
    %v516 = vunpack.c.l.b16 %v241
    %v517 = vunpack.c.h.b16 %v241
    %v518 = vunpack.c.l.b16 %v242
    %v519 = vunpack.c.h.b16 %v242
    %v520 = vunpack.c.l.b16 %v243
    %v521 = vunpack.c.h.b16 %v243
    %v522 = vunpack.c.l.b16 %v244
    %v523 = vunpack.c.h.b16 %v244
    %v524 = vunpack.c.l.b16 %v245
    %v525 = vunpack.c.h.b16 %v245
    %v526 = vunpack.c.l.b16 %v246
    %v527 = vunpack.c.h.b16 %v246
    %v528 = vunpack.c.l.b16 %v247
    %v529 = vunpack.c.h.b16 %v247
    %v530 = vunpack.c.l.b16 %v248
    %v531 = vunpack.c.h.b16 %v248
    %v532 = vunpack.c.l.b16 %v249
    %v533 = vunpack.c.h.b16 %v249
    %v534 = vunpack.c.l.b16 %v250
    %v535 = vunpack.c.h.b16 %v250
    %v536 = vunpack.c.l.b16 %v251
    %v537 = vunpack.c.h.b16 %v251
    %v538 = vunpack.c.l.b16 %v252
    %v539 = vunpack.c.h.b16 %v252
    %v540 = vunpack.c.l.b16 %v253
    %v541 = vunpack.c.h.b16 %v253
    %v542 = vunpack.c.l.b16 %v254
    %v543 = vunpack.c.h.b16 %v254
    %v544 = vunpack.c.l.b16 %v255
    %v545 = vunpack.c.h.b16 %v255
    %v546 = vunpack.c.l.b16 %v256
    %v547 = vunpack.c.h.b16 %v256
    %v548 = vunpack.c.l.b16 %v257
    %v549 = vunpack.c.h.b16 %v257
    %v550 = vunpack.c.l.b16 %v258
    %v551 = vunpack.c.h.b16 %v258
    %v552 = vunpack.c.l.b16 %v259
    %v553 = vunpack.c.h.b16 %v259
    %v554 = vunpack.c.l.b16 %v260
    %v555 = vunpack.c.h.b16 %v260
    %v556 = vunpack.c.l.b16 %v261
    %v557 = vunpack.c.h.b16 %v261
    %v558 = vunpack.c.l.b16 %v262
    %v559 = vunpack.c.h.b16 %v262
    %v560 = vunpack.c.l.b16 %v263
    %v561 = vunpack.c.h.b16 %v263
    %v562 = vunpack.c.l.b16 %v264
    %v563 = vunpack.c.h.b16 %v264
    %v564 = vunpack.c.l.b16 %v265
    %v565 = vunpack.c.h.b16 %v265
    %v566 = vpack.c.b16 %v372, %v370
    %v567 = vpack.c.b16 %v373, %v371
    %v568 = vpack.c.b16 %v376, %v374
    %v569 = vpack.c.b16 %v377, %v375
    %v570 = vpack.c.b16 %v380, %v378
    %v571 = vpack.c.b16 %v381, %v379
    %v572 = vpack.c.b16 %v384, %v382
    %v573 = vpack.c.b16 %v385, %v383
    %v574 = vpack.c.b16 %v388, %v386
    %v575 = vpack.c.b16 %v389, %v387
    %v576 = vpack.c.b16 %v392, %v390
    %v577 = vpack.c.b16 %v393, %v391
    %v578 = vpack.c.b16 %v396, %v394
    %v579 = vpack.c.b16 %v397, %v395
    %v580 = vpack.c.b16 %v400, %v398
    %v581 = vpack.c.b16 %v401, %v399
    %v582 = vpack.c.b16 %v404, %v402
    %v583 = vpack.c.b16 %v405, %v403
    %v584 = vpack.c.b16 %v408, %v406
    %v585 = vpack.c.b16 %v409, %v407
    %v586 = vpack.c.b16 %v412, %v410
    %v587 = vpack.c.b16 %v413, %v411
    %v588 = vpack.c.b16 %v416, %v414
    %v589 = vpack.c.b16 %v417, %v415
    %v590 = vpack.c.b16 %v420, %v418
    %v591 = vpack.c.b16 %v421, %v419
    %v592 = vpack.c.b16 %v424, %v422
    %v593 = vpack.c.b16 %v425, %v423
    %v594 = vpack.c.b16 %v428, %v426
    %v595 = vpack.c.b16 %v429, %v427
    %v596 = vpack.c.b16 %v432, %v430
    %v597 = vpack.c.b16 %v433, %v431
    %v598 = vpack.c.b16 %v436, %v434
    %v599 = vpack.c.b16 %v437, %v435
    %v600 = vpack.c.b16 %v440, %v438
    %v601 = vpack.c.b16 %v441, %v439
    %v602 = vpack.c.b16 %v444, %v442
    %v603 = vpack.c.b16 %v445, %v443
    %v604 = vpack.c.b16 %v448, %v446
    %v605 = vpack.c.b16 %v449, %v447
    %v606 = vpack.c.b16 %v452, %v450
    %v607 = vpack.c.b16 %v453, %v451
    %v608 = vpack.c.b16 %v456, %v454
    %v609 = vpack.c.b16 %v457, %v455
    %v610 = vpack.c.b16 %v460, %v458
    %v611 = vpack.c.b16 %v461, %v459
    %v612 = vpack.c.b16 %v464, %v462
    %v613 = vpack.c.b16 %v465, %v463
    %v614 = vpack.c.b16 %v468, %v466
    %v615 = vpack.c.b16 %v469, %v467
    %v616 = vpack.c.b16 %v472, %v470
    %v617 = vpack.c.b16 %v473, %v471
    %v618 = vpack.c.b16 %v476, %v474
    %v619 = vpack.c.b16 %v477, %v475
    %v620 = vpack.c.b16 %v480, %v478
    %v621 = vpack.c.b16 %v481, %v479
    %v622 = vpack.c.b16 %v484, %v482
    %v623 = vpack.c.b16 %v485, %v483
    %v624 = vpack.c.b16 %v488, %v486
    %v625 = vpack.c.b16 %v489, %v487
    %v626 = vpack.c.b16 %v492, %v490
    %v627 = vpack.c.b16 %v493, %v491
    %v628 = vpack.c.b16 %v496, %v494
    %v629 = vpack.c.b16 %v497, %v495
    %v630 = vpack.c.b16 %v500, %v498
    %v631 = vpack.c.b16 %v501, %v499
    %v632 = vpack.c.b16 %v504, %v502
    %v633 = vpack.c.b16 %v505, %v503
    %v634 = vpack.c.b16 %v508, %v506
    %v635 = vpack.c.b16 %v509, %v507
    %v636 = vpack.c.b16 %v512, %v510
    %v637 = vpack.c.b16 %v513, %v511
    %v638 = vpack.c.b16 %v516, %v514
    %v639 = vpack.c.b16 %v517, %v515
    %v640 = vpack.c.b16 %v520, %v518
    %v641 = vpack.c.b16 %v521, %v519
    %v642 = vpack.c.b16 %v524, %v522
    %v643 = vpack.c.b16 %v525, %v523
    %v644 = vpack.c.b16 %v528, %v526
    %v645 = vpack.c.b16 %v529, %v527
    %v646 = vpack.c.b16 %v532, %v530
    %v647 = vpack.c.b16 %v533, %v531
    %v648 = vpack.c.b16 %v536, %v534
    %v649 = vpack.c.b16 %v537, %v535
    %v650 = vpack.c.b16 %v540, %v538
    %v651 = vpack.c.b16 %v541, %v539
    %v652 = vpack.c.b16 %v544, %v542
    %v653 = vpack.c.b16 %v545, %v543
    %v654 = vpack.c.b16 %v548, %v546
    %v655 = vpack.c.b16 %v549, %v547
    %v656 = vpack.c.b16 %v552, %v550
    %v657 = vpack.c.b16 %v553, %v551
    %v658 = vpack.c.b16 %v556, %v554
    %v659 = vpack.c.b16 %v557, %v555
    %v660 = vpack.c.b16 %v560, %v558
    %v661 = vpack.c.b16 %v561, %v559
    %v662 = vpack.c.b16 %v564, %v562
    %v663 = vpack.c.b16 %v565, %v563
    %vm762 = vcmask 130048
    %v764 = vsel %vm762, %v160, 0
    %v767 = vsel %vm762, %v167, 0
    %769 = vmatpush.bf16.msra.mxu0 %v580
    %770 = vmatpush.bf16.msra.mxu0 %v578
    %771 = vmatpush.bf16.msra.mxu0 %v576
    %772 = vmatpush.bf16.msra.mxu0 %v574
    %773 = vmatpush.bf16.msra.mxu0 %v572
    %774 = vmatpush.bf16.msra.mxu0 %v570
    %775 = vmatpush.bf16.msra.mxu0 %v568
    %776 = vmatpush.bf16.msra.mxu0 %v566
    %777 = vmatmul.bf16.gmra.mxu0 %v154
    %v778 = vpop.f32.mrf.mxu0
    %v779 = vadd.f32 %v268, %v778
    %v780 = vpop.f32.mrf.mxu0
    %v781 = vadd.f32 %v268, %v780
    %782 = vmatmul.bf16.gmra.mxu0 %v161
    %v783 = vpop.f32.mrf.mxu0
    %v784 = vadd.f32 %v268, %v783
    %v785 = vpop.f32.mrf.mxu0
    %v786 = vadd.f32 %v268, %v785
    %787 = vdwg.mxu0
    %788 = vmatpush.bf16.msra.mxu0 %v596
    %789 = vmatpush.bf16.msra.mxu0 %v594
    %790 = vmatpush.bf16.msra.mxu0 %v592
    %791 = vmatpush.bf16.msra.mxu0 %v590
    %792 = vmatpush.bf16.msra.mxu0 %v588
    %793 = vmatpush.bf16.msra.mxu0 %v586
    %794 = vmatpush.bf16.msra.mxu0 %v584
    %795 = vmatpush.bf16.msra.mxu0 %v582
    %796 = vmatmul.bf16.gmra.mxu0 %v155
    %v797 = vpop.f32.mrf.mxu0
    %v798 = vadd.f32 %v779, %v797
    %v799 = vpop.f32.mrf.mxu0
    %v800 = vadd.f32 %v781, %v799
    %801 = vmatmul.bf16.gmra.mxu0 %v162
    %v802 = vpop.f32.mrf.mxu0
    %v803 = vadd.f32 %v784, %v802
    %v804 = vpop.f32.mrf.mxu0
    %v805 = vadd.f32 %v786, %v804
    %806 = vdwg.mxu0
    %807 = vmatpush.bf16.msra.mxu0 %v612
    %808 = vmatpush.bf16.msra.mxu0 %v610
    %809 = vmatpush.bf16.msra.mxu0 %v608
    %810 = vmatpush.bf16.msra.mxu0 %v606
    %811 = vmatpush.bf16.msra.mxu0 %v604
    %812 = vmatpush.bf16.msra.mxu0 %v602
    %813 = vmatpush.bf16.msra.mxu0 %v600
    %814 = vmatpush.bf16.msra.mxu0 %v598
    %815 = vmatmul.bf16.gmra.mxu0 %v156
    %v816 = vpop.f32.mrf.mxu0
    %v817 = vadd.f32 %v798, %v816
    %v818 = vpop.f32.mrf.mxu0
    %v819 = vadd.f32 %v800, %v818
    %820 = vmatmul.bf16.gmra.mxu0 %v163
    %v821 = vpop.f32.mrf.mxu0
    %v822 = vadd.f32 %v803, %v821
    %v823 = vpop.f32.mrf.mxu0
    %v824 = vadd.f32 %v805, %v823
    %825 = vdwg.mxu0
    %826 = vmatpush.bf16.msra.mxu0 %v628
    %827 = vmatpush.bf16.msra.mxu0 %v626
    %828 = vmatpush.bf16.msra.mxu0 %v624
    %829 = vmatpush.bf16.msra.mxu0 %v622
    %830 = vmatpush.bf16.msra.mxu0 %v620
    %831 = vmatpush.bf16.msra.mxu0 %v618
    %832 = vmatpush.bf16.msra.mxu0 %v616
    %833 = vmatpush.bf16.msra.mxu0 %v614
    %834 = vmatmul.bf16.gmra.mxu0 %v157
    %v835 = vpop.f32.mrf.mxu0
    %v836 = vadd.f32 %v817, %v835
    %v837 = vpop.f32.mrf.mxu0
    %v838 = vadd.f32 %v819, %v837
    %839 = vmatmul.bf16.gmra.mxu0 %v164
    %v840 = vpop.f32.mrf.mxu0
    %v841 = vadd.f32 %v822, %v840
    %v842 = vpop.f32.mrf.mxu0
    %v843 = vadd.f32 %v824, %v842
    %844 = vdwg.mxu0
    %845 = vmatpush.bf16.msra.mxu0 %v644
    %846 = vmatpush.bf16.msra.mxu0 %v642
    %847 = vmatpush.bf16.msra.mxu0 %v640
    %848 = vmatpush.bf16.msra.mxu0 %v638
    %849 = vmatpush.bf16.msra.mxu0 %v636
    %850 = vmatpush.bf16.msra.mxu0 %v634
    %851 = vmatpush.bf16.msra.mxu0 %v632
    %852 = vmatpush.bf16.msra.mxu0 %v630
    %853 = vmatmul.bf16.gmra.mxu0 %v158
    %v854 = vpop.f32.mrf.mxu0
    %v855 = vadd.f32 %v836, %v854
    %v856 = vpop.f32.mrf.mxu0
    %v857 = vadd.f32 %v838, %v856
    %858 = vmatmul.bf16.gmra.mxu0 %v165
    %v859 = vpop.f32.mrf.mxu0
    %v860 = vadd.f32 %v841, %v859
    %v861 = vpop.f32.mrf.mxu0
    %v862 = vadd.f32 %v843, %v861
    %863 = vdwg.mxu0
    %864 = vmatpush.bf16.msra.mxu0 %v660
    %865 = vmatpush.bf16.msra.mxu0 %v658
    %866 = vmatpush.bf16.msra.mxu0 %v656
    %867 = vmatpush.bf16.msra.mxu0 %v654
    %868 = vmatpush.bf16.msra.mxu0 %v652
    %869 = vmatpush.bf16.msra.mxu0 %v650
    %870 = vmatpush.bf16.msra.mxu0 %v648
    %871 = vmatpush.bf16.msra.mxu0 %v646
    %872 = vmatmul.bf16.gmra.mxu0 %v159
    %v873 = vpop.f32.mrf.mxu0
    %v874 = vadd.f32 %v855, %v873
    %v875 = vpop.f32.mrf.mxu0
    %v876 = vadd.f32 %v857, %v875
    %877 = vmatmul.bf16.gmra.mxu0 %v166
    %v878 = vpop.f32.mrf.mxu0
    %v879 = vadd.f32 %v860, %v878
    %v880 = vpop.f32.mrf.mxu0
    %v881 = vadd.f32 %v862, %v880
    %882 = vdwg.mxu0
    %883 = vmatpush.bf16.msra.mxu0 0
    %884 = vmatpush.bf16.msra.mxu0 0
    %885 = vmatpush.bf16.msra.mxu0 0
    %886 = vmatpush.bf16.msra.mxu0 0
    %887 = vmatpush.bf16.msra.mxu0 0
    %888 = vmatpush.bf16.msra.mxu0 0
    %889 = vmatpush.bf16.msra.mxu0 0
    %890 = vmatpush.bf16.msra.mxu0 %v662
    %891 = vmatmul.bf16.gmra.mxu0 %v764
    %v892 = vpop.f32.mrf.mxu0
    %v893 = vadd.f32 %v874, %v892
    %v894 = vpop.f32.mrf.mxu0
    %v895 = vadd.f32 %v876, %v894
    %896 = vmatmul.bf16.gmra.mxu0 %v767
    %v897 = vpop.f32.mrf.mxu0
    %v898 = vadd.f32 %v879, %v897
    %v899 = vpop.f32.mrf.mxu0
    %v900 = vadd.f32 %v881, %v899
    %901 = vdwg.mxu0
    %902 = vmatpush.bf16.msra.mxu0 %v581
    %903 = vmatpush.bf16.msra.mxu0 %v579
    %904 = vmatpush.bf16.msra.mxu0 %v577
    %905 = vmatpush.bf16.msra.mxu0 %v575
    %906 = vmatpush.bf16.msra.mxu0 %v573
    %907 = vmatpush.bf16.msra.mxu0 %v571
    %908 = vmatpush.bf16.msra.mxu0 %v569
    %909 = vmatpush.bf16.msra.mxu0 %v567
    %910 = vmatmul.bf16.gmra.mxu0 %v154
    %v911 = vpop.f32.mrf.mxu0
    %v912 = vadd.f32 %v269, %v911
    %v913 = vpop.f32.mrf.mxu0
    %v914 = vadd.f32 %v269, %v913
    %915 = vmatmul.bf16.gmra.mxu0 %v161
    %v916 = vpop.f32.mrf.mxu0
    %v917 = vadd.f32 %v269, %v916
    %v918 = vpop.f32.mrf.mxu0
    %v919 = vadd.f32 %v269, %v918
    %920 = vdwg.mxu0
    %921 = vmatpush.bf16.msra.mxu0 %v597
    %922 = vmatpush.bf16.msra.mxu0 %v595
    %923 = vmatpush.bf16.msra.mxu0 %v593
    %924 = vmatpush.bf16.msra.mxu0 %v591
    %925 = vmatpush.bf16.msra.mxu0 %v589
    %926 = vmatpush.bf16.msra.mxu0 %v587
    %927 = vmatpush.bf16.msra.mxu0 %v585
    %928 = vmatpush.bf16.msra.mxu0 %v583
    %929 = vmatmul.bf16.gmra.mxu0 %v155
    %v930 = vpop.f32.mrf.mxu0
    %v931 = vadd.f32 %v912, %v930
    %v932 = vpop.f32.mrf.mxu0
    %v933 = vadd.f32 %v914, %v932
    %934 = vmatmul.bf16.gmra.mxu0 %v162
    %v935 = vpop.f32.mrf.mxu0
    %v936 = vadd.f32 %v917, %v935
    %v937 = vpop.f32.mrf.mxu0
    %v938 = vadd.f32 %v919, %v937
    %939 = vdwg.mxu0
    %940 = vmatpush.bf16.msra.mxu0 %v613
    %941 = vmatpush.bf16.msra.mxu0 %v611
    %942 = vmatpush.bf16.msra.mxu0 %v609
    %943 = vmatpush.bf16.msra.mxu0 %v607
    %944 = vmatpush.bf16.msra.mxu0 %v605
    %945 = vmatpush.bf16.msra.mxu0 %v603
    %946 = vmatpush.bf16.msra.mxu0 %v601
    %947 = vmatpush.bf16.msra.mxu0 %v599
    %948 = vmatmul.bf16.gmra.mxu0 %v156
    %v949 = vpop.f32.mrf.mxu0
    %v950 = vadd.f32 %v931, %v949
    %v951 = vpop.f32.mrf.mxu0
    %v952 = vadd.f32 %v933, %v951
    %953 = vmatmul.bf16.gmra.mxu0 %v163
    %v954 = vpop.f32.mrf.mxu0
    %v955 = vadd.f32 %v936, %v954
    %v956 = vpop.f32.mrf.mxu0
    %v957 = vadd.f32 %v938, %v956
    %958 = vdwg.mxu0
    %959 = vmatpush.bf16.msra.mxu0 %v629
    %960 = vmatpush.bf16.msra.mxu0 %v627
    %961 = vmatpush.bf16.msra.mxu0 %v625
    %962 = vmatpush.bf16.msra.mxu0 %v623
    %963 = vmatpush.bf16.msra.mxu0 %v621
    %964 = vmatpush.bf16.msra.mxu0 %v619
    %965 = vmatpush.bf16.msra.mxu0 %v617
    %966 = vmatpush.bf16.msra.mxu0 %v615
    %967 = vmatmul.bf16.gmra.mxu0 %v157
    %v968 = vpop.f32.mrf.mxu0
    %v969 = vadd.f32 %v950, %v968
    %v970 = vpop.f32.mrf.mxu0
    %v971 = vadd.f32 %v952, %v970
    %972 = vmatmul.bf16.gmra.mxu0 %v164
    %v973 = vpop.f32.mrf.mxu0
    %v974 = vadd.f32 %v955, %v973
    %v975 = vpop.f32.mrf.mxu0
    %v976 = vadd.f32 %v957, %v975
    %977 = vdwg.mxu0
    %978 = vmatpush.bf16.msra.mxu0 %v645
    %979 = vmatpush.bf16.msra.mxu0 %v643
    %980 = vmatpush.bf16.msra.mxu0 %v641
    %981 = vmatpush.bf16.msra.mxu0 %v639
    %982 = vmatpush.bf16.msra.mxu0 %v637
    %983 = vmatpush.bf16.msra.mxu0 %v635
    %984 = vmatpush.bf16.msra.mxu0 %v633
    %985 = vmatpush.bf16.msra.mxu0 %v631
    %986 = vmatmul.bf16.gmra.mxu0 %v158
    %v987 = vpop.f32.mrf.mxu0
    %v988 = vadd.f32 %v969, %v987
    %v989 = vpop.f32.mrf.mxu0
    %v990 = vadd.f32 %v971, %v989
    %991 = vmatmul.bf16.gmra.mxu0 %v165
    %v992 = vpop.f32.mrf.mxu0
    %v993 = vadd.f32 %v974, %v992
    %v994 = vpop.f32.mrf.mxu0
    %v995 = vadd.f32 %v976, %v994
    %996 = vdwg.mxu0
    %997 = vmatpush.bf16.msra.mxu0 %v661
    %998 = vmatpush.bf16.msra.mxu0 %v659
    %999 = vmatpush.bf16.msra.mxu0 %v657
    %1000 = vmatpush.bf16.msra.mxu0 %v655
    %1001 = vmatpush.bf16.msra.mxu0 %v653
    %1002 = vmatpush.bf16.msra.mxu0 %v651
    %1003 = vmatpush.bf16.msra.mxu0 %v649
    %1004 = vmatpush.bf16.msra.mxu0 %v647
    %1005 = vmatmul.bf16.gmra.mxu0 %v159
    %v1006 = vpop.f32.mrf.mxu0
    %v1007 = vadd.f32 %v988, %v1006
    %v1008 = vpop.f32.mrf.mxu0
    %v1009 = vadd.f32 %v990, %v1008
    %1010 = vmatmul.bf16.gmra.mxu0 %v166
    %v1011 = vpop.f32.mrf.mxu0
    %v1012 = vadd.f32 %v993, %v1011
    %v1013 = vpop.f32.mrf.mxu0
    %v1014 = vadd.f32 %v995, %v1013
    %1015 = vdwg.mxu0
    %1016 = vmatpush.bf16.msra.mxu0 0
    %1017 = vmatpush.bf16.msra.mxu0 0
    %1018 = vmatpush.bf16.msra.mxu0 0
    %1019 = vmatpush.bf16.msra.mxu0 0
    %1020 = vmatpush.bf16.msra.mxu0 0
    %1021 = vmatpush.bf16.msra.mxu0 0
    %1022 = vmatpush.bf16.msra.mxu0 0
    %1023 = vmatpush.bf16.msra.mxu0 %v663
    %1024 = vmatmul.bf16.gmra.mxu0 %v764
    %v1025 = vpop.f32.mrf.mxu0
    %v1026 = vadd.f32 %v1007, %v1025
    %v1027 = vpop.f32.mrf.mxu0
    %v1028 = vadd.f32 %v1009, %v1027
    %1029 = vmatmul.bf16.gmra.mxu0 %v767
    %v1030 = vpop.f32.mrf.mxu0
    %v1031 = vadd.f32 %v1012, %v1030
    %v1032 = vpop.f32.mrf.mxu0
    %v1033 = vadd.f32 %v1014, %v1032
    %1034 = vdwg.mxu0
    %v1035 = vmax.f32 %v893, 0.0
    %v1036 = vmax.f32 %v1026, 0.0
    %v1037 = vmax.f32 %v895, 0.0
    %v1038 = vmax.f32 %v1028, 0.0
    %v1039 = vmax.f32 %v898, 0.0
    %v1040 = vmax.f32 %v1031, 0.0
    %v1041 = vmax.f32 %v900, 0.0
    %v1042 = vmax.f32 %v1033, 0.0
    %v1043 = vpack.c.bf16 %v1037, %v1035
    %v1044 = vpack.c.bf16 %v1038, %v1036
    %v1045 = vpack.c.bf16 %v1041, %v1039
    %v1046 = vpack.c.bf16 %v1042, %v1040
    %v1047 = vld [vmem:[#allocation8] sm:$0xf]
    %v1048 = vld [vmem:[#allocation8 + $0x4] sm:$0xf]
    %v1049 = vld [vmem:[#allocation8 + $0x8] sm:$0xf]
    %v1050 = vld [vmem:[#allocation8 + $0xc] sm:$0xf]
    %v1051 = vld [vmem:[#allocation8 + $0x10] sm:$0xf]
    %v1052 = vld [vmem:[#allocation8 + $0x14] sm:$0xf]
    %v1053 = vld [vmem:[#allocation8 + $0x18] sm:$0xf]
    %v1054 = vld [vmem:[#allocation8 + $0x1c] sm:$0xf]
    %v1055 = vld [vmem:[#allocation8 + $0x20] sm:$0xf]
    %v1056 = vld [vmem:[#allocation8 + $0x24] sm:$0xf]
    %v1057 = vld [vmem:[#allocation8 + $0x28] sm:$0xf]
    %v1058 = vld [vmem:[#allocation8 + $0x2c] sm:$0xf]
    %v1059 = vld [vmem:[#allocation8 + $0x30] sm:$0xf]
    %v1060 = vld [vmem:[#allocation8 + $0x34] sm:$0xf]
    %v1061 = vld [vmem:[#allocation8 + $0x38] sm:$0xf]
    %v1062 = vld [vmem:[#allocation8 + $0x3c] sm:$0xf]
    %v1063 = vld [vmem:[#allocation8 + $0x40] sm:$0xf]
    %v1064 = vld [vmem:[#allocation8 + $0x44] sm:$0xf]
    %v1065 = vld [vmem:[#allocation8 + $0x48] sm:$0xf]
    %v1066 = vld [vmem:[#allocation8 + $0x4c] sm:$0xf]
    %v1067 = vld [vmem:[#allocation8 + $0x50] sm:$0xf]
    %v1068 = vld [vmem:[#allocation8 + $0x54] sm:$0xf]
    %v1069 = vld [vmem:[#allocation8 + $0x58] sm:$0xf]
    %v1070 = vld [vmem:[#allocation8 + $0x5c] sm:$0xf]
    %v1071 = vld [vmem:[#allocation8 + $0x60] sm:$0xf]
    %v1072 = vld [vmem:[#allocation8 + $0x64] sm:$0xf]
    %v1073 = vld [vmem:[#allocation8 + $0x68] sm:$0xf]
    %v1074 = vld [vmem:[#allocation8 + $0x6c] sm:$0xf]
    %v1075 = vld [vmem:[#allocation8 + $0x70] sm:$0xf]
    %v1076 = vld [vmem:[#allocation8 + $0x74] sm:$0xf]
    %v1077 = vld [vmem:[#allocation8 + $0x78] sm:$0xf]
    %v1078 = vld [vmem:[#allocation8 + $0x7c] sm:$0xf]
    %v1079 = vld [vmem:[%s4] sm:$0x1]
    %v1081 = vperm.slane %v1079, 0
    %v1115 = vunpack.c.l.b16 %v1047
    %v1116 = vunpack.c.l.b16 %v1048
    %v1117 = vunpack.c.l.b16 %v1049
    %v1118 = vunpack.c.l.b16 %v1050
    %v1119 = vunpack.c.l.b16 %v1051
    %v1120 = vunpack.c.l.b16 %v1052
    %v1121 = vunpack.c.l.b16 %v1053
    %v1122 = vunpack.c.l.b16 %v1054
    %v1123 = vunpack.c.l.b16 %v1055
    %v1124 = vunpack.c.l.b16 %v1056
    %v1125 = vunpack.c.l.b16 %v1057
    %v1126 = vunpack.c.l.b16 %v1058
    %v1127 = vunpack.c.l.b16 %v1059
    %v1128 = vunpack.c.l.b16 %v1060
    %v1129 = vunpack.c.l.b16 %v1061
    %v1130 = vunpack.c.l.b16 %v1062
    %v1131 = vunpack.c.l.b16 %v1063
    %v1132 = vunpack.c.l.b16 %v1064
    %v1133 = vunpack.c.l.b16 %v1065
    %v1134 = vunpack.c.l.b16 %v1066
    %v1135 = vunpack.c.l.b16 %v1067
    %v1136 = vunpack.c.l.b16 %v1068
    %v1137 = vunpack.c.l.b16 %v1069
    %v1138 = vunpack.c.l.b16 %v1070
    %v1139 = vunpack.c.l.b16 %v1071
    %v1140 = vunpack.c.l.b16 %v1072
    %v1141 = vunpack.c.l.b16 %v1073
    %v1142 = vunpack.c.l.b16 %v1074
    %v1143 = vunpack.c.l.b16 %v1075
    %v1144 = vunpack.c.l.b16 %v1076
    %v1145 = vunpack.c.l.b16 %v1077
    %v1146 = vunpack.c.l.b16 %v1078
    %v1147 = vpack.c.b16 %v1116, %v1115
    %v1148 = vpack.c.b16 %v1118, %v1117
    %v1149 = vpack.c.b16 %v1120, %v1119
    %v1150 = vpack.c.b16 %v1122, %v1121
    %v1151 = vpack.c.b16 %v1124, %v1123
    %v1152 = vpack.c.b16 %v1126, %v1125
    %v1153 = vpack.c.b16 %v1128, %v1127
    %v1154 = vpack.c.b16 %v1130, %v1129
    %v1155 = vpack.c.b16 %v1132, %v1131
    %v1156 = vpack.c.b16 %v1134, %v1133
    %v1157 = vpack.c.b16 %v1136, %v1135
    %v1158 = vpack.c.b16 %v1138, %v1137
    %v1159 = vpack.c.b16 %v1140, %v1139
    %v1160 = vpack.c.b16 %v1142, %v1141
    %v1161 = vpack.c.b16 %v1144, %v1143
    %v1162 = vpack.c.b16 %v1146, %v1145
    %1179 = vmatpush.bf16.msra.mxu0 %v1154
    %1180 = vmatpush.bf16.msra.mxu0 %v1153
    %1181 = vmatpush.bf16.msra.mxu0 %v1152
    %1182 = vmatpush.bf16.msra.mxu0 %v1151
    %1183 = vmatpush.bf16.msra.mxu0 %v1150
    %1184 = vmatpush.bf16.msra.mxu0 %v1149
    %1185 = vmatpush.bf16.msra.mxu0 %v1148
    %1186 = vmatpush.bf16.msra.mxu0 %v1147
    %1187 = vmatmul.bf16.gmra.mxu0 %v1043
    %v1188 = vpop.f32.mrf.mxu0
    %v1189 = vadd.f32 %v1081, %v1188
    %v1190 = vpop.f32.mrf.mxu0
    %v1191 = vadd.f32 %v1081, %v1190
    %1192 = vmatmul.bf16.gmra.mxu0 %v1045
    %v1193 = vpop.f32.mrf.mxu0
    %v1194 = vadd.f32 %v1081, %v1193
    %v1195 = vpop.f32.mrf.mxu0
    %v1196 = vadd.f32 %v1081, %v1195
    %1197 = vdwg.mxu0
    %1198 = vmatpush.bf16.msra.mxu0 %v1162
    %1199 = vmatpush.bf16.msra.mxu0 %v1161
    %1200 = vmatpush.bf16.msra.mxu0 %v1160
    %1201 = vmatpush.bf16.msra.mxu0 %v1159
    %1202 = vmatpush.bf16.msra.mxu0 %v1158
    %1203 = vmatpush.bf16.msra.mxu0 %v1157
    %1204 = vmatpush.bf16.msra.mxu0 %v1156
    %1205 = vmatpush.bf16.msra.mxu0 %v1155
    %1206 = vmatmul.bf16.gmra.mxu0 %v1044
    %v1207 = vpop.f32.mrf.mxu0
    %v1208 = vadd.f32 %v1189, %v1207
    %v1209 = vpop.f32.mrf.mxu0
    %v1210 = vadd.f32 %v1191, %v1209
    %1211 = vmatmul.bf16.gmra.mxu0 %v1046
    %v1212 = vpop.f32.mrf.mxu0
    %v1213 = vadd.f32 %v1194, %v1212
    %v1214 = vpop.f32.mrf.mxu0
    %v1215 = vadd.f32 %v1196, %v1214
    %1216 = vdwg.mxu0
    %v1217 = vmax.f32 %v1208, 0.0
    %v1218 = vmax.f32 %v1210, 0.0
    %v1219 = vmax.f32 %v1213, 0.0
    %v1220 = vmax.f32 %v1215, 0.0
    %v1221 = vpack.c.bf16 %v1218, %v1217
    %v1222 = vpack.c.bf16 %v1220, %v1219
    %v1223 = vld [vmem:[#allocation10] sm:$0xf]
    %v1224 = vld [vmem:[#allocation10 + $0x4] sm:$0xf]
    %v1225 = vld [vmem:[#allocation10 + $0x8] sm:$0xf]
    %v1226 = vld [vmem:[#allocation10 + $0xc] sm:$0xf]
    %v1227 = vld [vmem:[#allocation10 + $0x10] sm:$0xf]
    %v1228 = vld [vmem:[#allocation10 + $0x14] sm:$0xf]
    %v1229 = vld [vmem:[#allocation10 + $0x18] sm:$0xf]
    %v1230 = vld [vmem:[#allocation10 + $0x1c] sm:$0xf]
    %v1231 = vld [vmem:[#allocation10 + $0x20] sm:$0xf]
    %v1232 = vld [vmem:[#allocation10 + $0x24] sm:$0xf]
    %v1233 = vld [vmem:[#allocation10 + $0x28] sm:$0xf]
    %v1234 = vld [vmem:[#allocation10 + $0x2c] sm:$0xf]
    %v1235 = vld [vmem:[#allocation10 + $0x30] sm:$0xf]
    %v1236 = vld [vmem:[#allocation10 + $0x34] sm:$0xf]
    %v1237 = vld [vmem:[#allocation10 + $0x38] sm:$0xf]
    %v1238 = vld [vmem:[#allocation10 + $0x3c] sm:$0xf]
    %v1239 = vld [vmem:[%s6] sm:$0x1]
    %v1241 = vperm.slane %v1239, 0
    %v1259 = vunpack.c.l.b16 %v1223
    %v1260 = vunpack.c.l.b16 %v1224
    %v1261 = vunpack.c.l.b16 %v1225
    %v1262 = vunpack.c.l.b16 %v1226
    %v1263 = vunpack.c.l.b16 %v1227
    %v1264 = vunpack.c.l.b16 %v1228
    %v1265 = vunpack.c.l.b16 %v1229
    %v1266 = vunpack.c.l.b16 %v1230
    %v1267 = vunpack.c.l.b16 %v1231
    %v1268 = vunpack.c.l.b16 %v1232
    %v1269 = vunpack.c.l.b16 %v1233
    %v1270 = vunpack.c.l.b16 %v1234
    %v1271 = vunpack.c.l.b16 %v1235
    %v1272 = vunpack.c.l.b16 %v1236
    %v1273 = vunpack.c.l.b16 %v1237
    %v1274 = vunpack.c.l.b16 %v1238
    %v1275 = vpack.c.b16 %v1260, %v1259
    %v1276 = vpack.c.b16 %v1262, %v1261
    %v1277 = vpack.c.b16 %v1264, %v1263
    %v1278 = vpack.c.b16 %v1266, %v1265
    %v1279 = vpack.c.b16 %v1268, %v1267
    %v1280 = vpack.c.b16 %v1270, %v1269
    %v1281 = vpack.c.b16 %v1272, %v1271
    %v1282 = vpack.c.b16 %v1274, %v1273
    %1291 = vmatpush.bf16.msra.mxu0 %v1282
    %1292 = vmatpush.bf16.msra.mxu0 %v1281
    %1293 = vmatpush.bf16.msra.mxu0 %v1280
    %1294 = vmatpush.bf16.msra.mxu0 %v1279
    %1295 = vmatpush.bf16.msra.mxu0 %v1278
    %1296 = vmatpush.bf16.msra.mxu0 %v1277
    %1297 = vmatpush.bf16.msra.mxu0 %v1276
    %1298 = vmatpush.bf16.msra.mxu0 %v1275
    %1299 = vmatmul.bf16.gmra.mxu0 %v1221
    %v1300 = vpop.f32.mrf.mxu0
    %v1301 = vadd.f32 %v1241, %v1300
    %v1302 = vpop.f32.mrf.mxu0
    %v1303 = vadd.f32 %v1241, %v1302
    %1304 = vmatmul.bf16.gmra.mxu0 %v1222
    %v1305 = vpop.f32.mrf.mxu0
    %v1306 = vadd.f32 %v1241, %v1305
    %v1307 = vpop.f32.mrf.mxu0
    %v1308 = vadd.f32 %v1241, %v1307
    %1309 = vdwg.mxu0
    %v1310 = vmax.f32 %v1301, 0.0
    %v1311 = vmax.f32 %v1303, 0.0
    %v1312 = vmax.f32 %v1306, 0.0
    %v1313 = vmax.f32 %v1308, 0.0
    %v1314 = vpack.c.bf16 %v1311, %v1310
    %v1315 = vpack.c.bf16 %v1313, %v1312
    %v1316 = vld [vmem:[#allocation11] sm:$0xf]
    %v1317 = vld [vmem:[#allocation11 + $0x4] sm:$0xf]
    %v1318 = vld [vmem:[#allocation11 + $0x8] sm:$0xf]
    %v1319 = vld [vmem:[#allocation11 + $0xc] sm:$0xf]
    %v1320 = vld [vmem:[#allocation11 + $0x10] sm:$0xf]
    %v1321 = vld [vmem:[#allocation11 + $0x14] sm:$0xf]
    %v1322 = vld [vmem:[#allocation11 + $0x18] sm:$0xf]
    %v1323 = vld [vmem:[#allocation11 + $0x1c] sm:$0xf]
    %v1324 = vld [vmem:[#allocation11 + $0x20] sm:$0xf]
    %v1325 = vld [vmem:[#allocation11 + $0x24] sm:$0xf]
    %v1326 = vld [vmem:[#allocation11 + $0x28] sm:$0xf]
    %v1327 = vld [vmem:[#allocation11 + $0x2c] sm:$0xf]
    %v1328 = vld [vmem:[#allocation11 + $0x30] sm:$0xf]
    %v1329 = vld [vmem:[#allocation11 + $0x34] sm:$0xf]
    %v1330 = vld [vmem:[#allocation11 + $0x38] sm:$0xf]
    %v1331 = vld [vmem:[#allocation11 + $0x3c] sm:$0xf]
    %v1332 = vld [vmem:[%s8] sm:$0x1]
    %v1334 = vperm.slane %v1332, 0
    %v1352 = vunpack.c.l.b16 %v1316
    %v1353 = vunpack.c.l.b16 %v1317
    %v1354 = vunpack.c.l.b16 %v1318
    %v1355 = vunpack.c.l.b16 %v1319
    %v1356 = vunpack.c.l.b16 %v1320
    %v1357 = vunpack.c.l.b16 %v1321
    %v1358 = vunpack.c.l.b16 %v1322
    %v1359 = vunpack.c.l.b16 %v1323
    %v1360 = vunpack.c.l.b16 %v1324
    %v1361 = vunpack.c.l.b16 %v1325
    %v1362 = vunpack.c.l.b16 %v1326
    %v1363 = vunpack.c.l.b16 %v1327
    %v1364 = vunpack.c.l.b16 %v1328
    %v1365 = vunpack.c.l.b16 %v1329
    %v1366 = vunpack.c.l.b16 %v1330
    %v1367 = vunpack.c.l.b16 %v1331
    %v1368 = vpack.c.b16 %v1353, %v1352
    %v1369 = vpack.c.b16 %v1355, %v1354
    %v1370 = vpack.c.b16 %v1357, %v1356
    %v1371 = vpack.c.b16 %v1359, %v1358
    %v1372 = vpack.c.b16 %v1361, %v1360
    %v1373 = vpack.c.b16 %v1363, %v1362
    %v1374 = vpack.c.b16 %v1365, %v1364
    %v1375 = vpack.c.b16 %v1367, %v1366
    %1384 = vmatpush.bf16.msra.mxu0 %v1375
    %1385 = vmatpush.bf16.msra.mxu0 %v1374
    %1386 = vmatpush.bf16.msra.mxu0 %v1373
    %1387 = vmatpush.bf16.msra.mxu0 %v1372
    %1388 = vmatpush.bf16.msra.mxu0 %v1371
    %1389 = vmatpush.bf16.msra.mxu0 %v1370
    %1390 = vmatpush.bf16.msra.mxu0 %v1369
    %1391 = vmatpush.bf16.msra.mxu0 %v1368
    %1392 = vmatmul.bf16.gmra.mxu0 %v1314
    %v1393 = vpop.f32.mrf.mxu0
    %v1394 = vadd.f32 %v1334, %v1393
    %v1395 = vpop.f32.mrf.mxu0
    %v1396 = vadd.f32 %v1334, %v1395
    %1397 = vmatmul.bf16.gmra.mxu0 %v1315
    %v1398 = vpop.f32.mrf.mxu0
    %v1399 = vadd.f32 %v1334, %v1398
    %v1400 = vpop.f32.mrf.mxu0
    %v1401 = vadd.f32 %v1334, %v1400
    %1402 = vdwg.mxu0
    %v1403 = vlaneseq
    %v1404 = vand.u32 %v1403, 127
    %vm1405 = vcmp.lt.s32.totalorder %v1404, 10
    %v1406 = vsel %vm1405, %v1394, -inf
    %v1407 = vsel %vm1405, %v1396, -inf
    %v1408 = vsel %vm1405, %v1399, -inf
    %v1409 = vsel %vm1405, %v1401, -inf
    %1410 = vmax.xlane.f32.xlu0 %v1406
    %v1411 = vpop.xlane.xlu0 %1410
    %1412 = vmax.xlane.f32.xlu0 %v1407
    %v1413 = vpop.xlane.xlu0 %1412
    %1414 = vmax.xlane.f32.xlu0 %v1408
    %v1415 = vpop.xlane.xlu0 %1414
    %1416 = vmax.xlane.f32.xlu0 %v1409
    %v1417 = vpop.xlane.xlu0 %1416
    %v1418 = vsub.f32 %v1406, %v1411
    %v1419 = vsub.f32 %v1407, %v1413
    %v1420 = vsub.f32 %v1408, %v1415
    %v1421 = vsub.f32 %v1409, %v1417
    %v1422 = vmul.f32 %v1418, 1.442695
    %v1423 = vpow.pop %v1422
    %v1424 = vmul.f32 %v1419, 1.442695
    %v1425 = vpow.pop %v1424
    %v1426 = vmul.f32 %v1420, 1.442695
    %v1427 = vpow.pop %v1426
    %v1428 = vmul.f32 %v1421, 1.442695
    %v1429 = vpow.pop %v1428
    %1430 = vadd.xlane.f32.xlu0 %v1423
    %v1431 = vpop.xlane.xlu0 %1430
    %1432 = vadd.xlane.f32.xlu0 %v1425
    %v1433 = vpop.xlane.xlu0 %1432
    %1434 = vadd.xlane.f32.xlu0 %v1427
    %v1435 = vpop.xlane.xlu0 %1434
    %1436 = vadd.xlane.f32.xlu0 %v1429
    %v1437 = vpop.xlane.xlu0 %1436
    %v1438 = vlog2.pop %v1431
    %v1439 = vmul.f32 %v1438, 0.6931472
    %v1440 = vlog2.pop %v1433
    %v1441 = vmul.f32 %v1440, 0.6931472
    %v1442 = vlog2.pop %v1435
    %v1443 = vmul.f32 %v1442, 0.6931472
    %v1444 = vlog2.pop %v1437
    %v1445 = vmul.f32 %v1444, 0.6931472
    %v1446 = vsub.f32 %v1418, %v1439
    %v1447 = vsub.f32 %v1419, %v1441
    %v1448 = vsub.f32 %v1420, %v1443
    %v1449 = vsub.f32 %v1421, %v1445
    %v1450 = vpack.c.bf16 %v1446, %v1446
    %v1451 = vpack.c.bf16 %v1447, %v1447
    %v1452 = vpack.c.bf16 %v1448, %v1448
    %v1453 = vpack.c.bf16 %v1449, %v1449
    %1454 = vst [vmem:[#allocation13] sm:$0xf] %v1450
    %1455 = vst [vmem:[#allocation13 + $0x4] sm:$0xf] %v1451
    %1456 = vst [vmem:[#allocation13 + $0x8] sm:$0xf] %v1452
    %1457 = vst [vmem:[#allocation13 + $0xc] sm:$0xf] %v1453
    // Predicated region
    $region62: #{tpu_custom_call.1} parent=1 // pred_check
      _
    $region63: #{tpu_custom_call.1} parent=1 // pred_check_branch
      %1459 = sbr.rel (0) target = $region65
    $region64: #{tpu_custom_call.1} parent=1 // pred_region
      %1461 = vsyncadd [#allocation4], 192
      %s1462 = sshll.u32 [#allocation13], 4
      %s1463 = int_to_ptr.vmem [resolvable:$true] %s1462
      %s1464 = sshll.u32 %s9, 4
      %s1465 = int_to_ptr.hbm [resolvable:$true] %s1464
      %1470 = dma.vmem_to_hbm [thread:$0]  %s1463, 64, %s1465, [#allocation4], 64, 64, 4
    $region65: #{tpu_custom_call.1} parent=1 // pred_fallthru
      _
    // Predicated region
    $region66: #{tpu_custom_call.1} parent=1 // pred_check
      _
    $region67: #{tpu_custom_call.1} parent=1 // pred_check_branch
      %1472 = sbr.rel (0) target = $region69
    $region68: #{tpu_custom_call.1} parent=1 // pred_region
      %1474 = dma.done [#allocation4], 256
    $region69: #{tpu_custom_call.1} parent=1 // pred_fallthru
      _
    %1475 = vsyncpa [#allocation3], 1
    %1476 = vsyncpa [#allocation6], 1
    %1477 = vsyncpa [#allocation9], 1
    %1478 = vsyncpa [#allocation12], 1
    %1479 = vsyncpa [#allocation4], 1

</llo_original>
